<compile_context>
chip_gen: v6e
topology: v6e:2x2x1
jax: 0.10.0
libtpu: 0.0.40
codegen_flags: <defaults>
</compile_context>

<pallas_src>
import jax
import jax.numpy as jnp
from jax.experimental import pallas as pl
from jax.experimental.pallas import tpu as pltpu

ALPHA = 0.25
GAMMA = 2.0                 # statically 2.0 -> lowered as an explicit square

LANE = 128                  # TPU lane width
BLOCK_ROWS_TARGET = 1024    # (1024, 128) f32 block = 512 KiB / input buffer
ROW_ALIGN = 8               # sublane alignment for f32


def _focal_elementwise(x, t):
    """Numerically stable focal loss matching the torch module.

    torch: p = sigmoid(x); BCE = -(t*log p + (1-t)*log(1-p))  (logs clamped at -100)
           at = a*t + (1-a)*(1-t); pt = exp(-BCE); F = at*(1-pt)**gamma*BCE
    Here: -log(p) = softplus(-x), -log(1-p) = softplus(x); both softpluses share
    a single exp + log (EUP); pt = exp(-bce) is the third EUP op. Rest is VPU.
    """
    e = jnp.exp(-jnp.abs(x))                       # EUP 1
    l1p = jnp.log(1.0 + e)                         # EUP 2
    sp_pos = jnp.maximum(x, 0.0) + l1p             # softplus(x)  = -log(1-p)
    sp_neg = jnp.maximum(-x, 0.0) + l1p            # softplus(-x) = -log(p)
    # F.binary_cross_entropy clamps each log term at -100.
    bce = t * jnp.minimum(sp_neg, 100.0) + (1.0 - t) * jnp.minimum(sp_pos, 100.0)
    pt = jnp.exp(-bce)                             # EUP 3
    one_m_pt = 1.0 - pt
    at = ALPHA * t + (1.0 - ALPHA) * (1.0 - t)
    return at * (one_m_pt * one_m_pt) * bce        # gamma == 2 -> square


def _make_reduce_kernel(block_rows, steps_per_core, n_valid, needs_mask):
    """Sum(focal) kernel. Grid = (cores, steps); VMEM vector accumulator."""

    def kernel(x_ref, t_ref, out_ref, acc_ref):
        c = pl.program_id(0)
        s = pl.program_id(1)

        @pl.when(s == 0)
        def _():
            acc_ref[...] = jnp.zeros_like(acc_ref)

        x = x_ref[...].astype(jnp.float32)
        t = t_ref[...].astype(jnp.float32)
        f = _focal_elementwise(x, t)

        if needs_mask:
            # Zero out the tail (pad region / out-of-bounds rows of the last
            # uneven block).  Pure VPU: iota + compare + select.
            blk = c * steps_per_core + s
            row = jax.lax.broadcasted_iota(jnp.int32, (block_rows, LANE), 0)
            col = jax.lax.broadcasted_iota(jnp.int32, (block_rows, LANE), 1)
            gidx = (blk * block_rows + row) * LANE + col
            f = jnp.where(gidx < n_valid, f, 0.0)

        acc_ref[...] += f  # per-step cost is just VPU adds

        @pl.when(s == pl.num_programs(1) - 1)
        def _():
            out_ref[0, 0] = jnp.sum(acc_ref[...])  # single cross-lane reduce

    return kernel


def _elementwise_kernel(x_ref, t_ref, o_ref):
    """Per-element focal loss (reduction='none')."""
    x = x_ref[...].astype(jnp.float32)
    t = t_ref[...].astype(jnp.float32)
    o_ref[...] = _focal_elementwise(x, t)


def binary_focal_loss(inputs, targets, reduction="mean"):
    orig_shape = inputs.shape
    n = int(inputs.size)

    x = inputs.reshape(-1).astype(jnp.float32)
    # Targets are {0,1}: ship as bf16 to halve that HBM stream, upcast in-kernel.
    t = targets.reshape(-1).astype(jnp.bfloat16)

    # Pad only when the flat size is not a whole number of (8,128) rows
    # (static decision; the common aligned case does no extra copies).
    row_elems = ROW_ALIGN * LANE
    n_pad = pl.cdiv(n, row_elems) * row_elems
    if n_pad != n:
        x = jnp.pad(x, (0, n_pad - n))
        t = jnp.pad(t, (0, n_pad - n))

    rows = n_pad // LANE                       # multiple of 8
    block_rows = min(BLOCK_ROWS_TARGET, rows)  # big block; full-dim if small
    num_blocks = pl.cdiv(rows, block_rows)
    x2 = x.reshape(rows, LANE)
    t2 = t.reshape(rows, LANE)

    if reduction in ("mean", "sum"):
        # Any covered-but-invalid elements (pad tail or uneven last block)?
        needs_mask = (num_blocks * block_rows * LANE != n)
        # Leading parallel axis so both v7x TensorCores get work.
        ncores = 2 if (num_blocks % 2 == 0 and num_blocks >= 2) else 1
        steps = num_blocks // ncores

        kernel = _make_reduce_kernel(block_rows, steps, n, needs_mask)
        tile_spec = pl.BlockSpec((block_rows, LANE),
                                 lambda c, s: (c * steps + s, 0))
        partials = pl.pallas_call(
            kernel,
            out_shape=jax.ShapeDtypeStruct((ncores, 1), jnp.float32),
            grid_spec=pltpu.PrefetchScalarGridSpec(
                num_scalar_prefetch=0,
                grid=(ncores, steps),
                in_specs=[tile_spec, tile_spec],
                out_specs=pl.BlockSpec((1, 1), lambda c, s: (c, 0),
                                       memory_space=pltpu.SMEM),
                scratch_shapes=[pltpu.VMEM((block_rows, LANE), jnp.float32)]),
            compiler_params=pltpu.CompilerParams(
                dimension_semantics=("parallel", "arbitrary")),
        )(x2, t2)
        total = jnp.sum(partials)
        if reduction == "mean":
            return total / jnp.float32(n)
        return total
    else:  # reduction == 'none'
        tile_spec = pl.BlockSpec((block_rows, LANE), lambda i: (i, 0))
        f2 = pl.pallas_call(
            _elementwise_kernel,
            out_shape=jax.ShapeDtypeStruct((rows, LANE), jnp.float32),
            grid_spec=pltpu.PrefetchScalarGridSpec(
                num_scalar_prefetch=0,
                grid=(num_blocks,),
                in_specs=[tile_spec, tile_spec],
                out_specs=tile_spec),
            compiler_params=pltpu.CompilerParams(
                dimension_semantics=("parallel",)),
        )(x2, t2)
        if n_pad == n:
            return f2.reshape(orig_shape)
        return f2.reshape(-1)[:n].reshape(orig_shape)


if __name__ == "__main__":
    key = jax.random.PRNGKey(0)
    k1, k2 = jax.random.split(key)
    shape = (2, 4, 16, 16)  # PyTorch-style NCHW logits + binary targets
    x = jax.random.normal(k1, shape, dtype=jnp.float32)
    targets = jax.random.bernoulli(k2, p=0.3, shape=shape).astype(jnp.float32)

    # Torch-faithful pure-JAX reference (unstable form + the -100 log clamp).
    def _ref(xx, tt):
        p = jax.nn.sigmoid(xx)
        logp = jnp.maximum(jnp.log(p), -100.0)
        log1mp = jnp.maximum(jnp.log(1.0 - p), -100.0)
        bce = -(tt * logp + (1.0 - tt) * log1mp)
        at = ALPHA * tt + (1.0 - ALPHA) * (1.0 - tt)
        pt = jnp.exp(-bce)
        return at * (1.0 - pt) ** GAMMA * bce

    ref_el = _ref(x, targets)

    loss = jax.block_until_ready(binary_focal_loss(x, targets, "mean"))
    assert jnp.allclose(loss, jnp.mean(ref_el), rtol=1e-4, atol=1e-6), (
        loss, jnp.mean(ref_el))

    loss_sum = jax.block_until_ready(binary_focal_loss(x, targets, "sum"))
    assert jnp.allclose(loss_sum, jnp.sum(ref_el), rtol=1e-4, atol=1e-5), (
        loss_sum, jnp.sum(ref_el))

    loss_none = jax.block_until_ready(binary_focal_loss(x, targets, "none"))
    assert loss_none.shape == shape
    assert jnp.allclose(loss_none, ref_el, rtol=1e-4, atol=1e-6)

    # Exercise the unaligned / masked-tail path as well.
    x_odd = jax.random.normal(k1, (3, 5, 7), dtype=jnp.float32)
    t_odd = jax.random.bernoulli(k2, p=0.5, shape=(3, 5, 7)).astype(jnp.float32)
    loss_odd = jax.block_until_ready(binary_focal_loss(x_odd, t_odd, "mean"))
    assert jnp.allclose(loss_odd, jnp.mean(_ref(x_odd, t_odd)),
                        rtol=1e-4, atol=1e-6), (loss_odd,
                                                jnp.mean(_ref(x_odd, t_odd)))

    print("KERNEL_OK")
</pallas_src>

<mosaic_0001>
module attributes {stable_mosaic.version = 11 : i64} {
  func.func @kernel(%arg0: i32, %arg1: i32, %arg2: memref<16x128xf32, #tpu.memory_space<vmem>>, %arg3: memref<16x128xbf16, #tpu.memory_space<vmem>>, %arg4: memref<1x1xf32, #tpu.memory_space<smem>>, %arg5: memref<16x128xf32, #tpu.memory_space<vmem>>) attributes {dimension_semantics = [#tpu.dimension_semantics<parallel>, #tpu.dimension_semantics<arbitrary>], iteration_bounds = array<i64: 1, 1>, scalar_prefetch = 0 : i64, scratch_operands = 1 : i64, tpu.core_type = #tpu.core_type<tc>, window_params = [{transform_indices = @transform_0, window_bounds = array<i64: 16, 128>}, {transform_indices = @transform_1, window_bounds = array<i64: 16, 128>}, {transform_indices = @transform_2, window_bounds = array<i64: 1, 1>}]} {
    %c0_i32 = arith.constant 0 : i32
    %0 = arith.cmpi eq, %arg1, %c0_i32 : i32
    %1 = arith.extui %0 : i1 to i32
    %c0_i32_0 = arith.constant 0 : i32
    %2 = arith.cmpi ne, %1, %c0_i32_0 : i32
    scf.if %2 {
      %cst_22 = arith.constant 0.000000e+00 : f32
      %51 = vector.broadcast %cst_22 : f32 to vector<16x128xf32>
      %c0_23 = arith.constant 0 : index
      %c0_24 = arith.constant 0 : index
      %52 = vector.load %arg5[%c0_23, %c0_24] : memref<16x128xf32, #tpu.memory_space<vmem>>, vector<16x128xf32>
      tpu.vector_store %arg5[%c0_23, %c0_24], %51 {strides = array<i32>} : memref<16x128xf32, #tpu.memory_space<vmem>>, vector<16x128xf32>,
    } else {
    }
    %c0 = arith.constant 0 : index
    %c0_1 = arith.constant 0 : index
    %3 = vector.load %arg2[%c0, %c0_1] : memref<16x128xf32, #tpu.memory_space<vmem>>, vector<16x128xf32>
    %c0_2 = arith.constant 0 : index
    %c0_3 = arith.constant 0 : index
    %4 = vector.load %arg3[%c0_2, %c0_3] : memref<16x128xbf16, #tpu.memory_space<vmem>>, vector<16x128xbf16>
    %5 = arith.extf %4 : vector<16x128xbf16> to vector<16x128xf32>
    %6 = math.absf %3 : vector<16x128xf32>
    %cst = arith.constant 0.000000e+00 : f32
    %7 = vector.broadcast %cst : f32 to vector<16x128xf32>
    %8 = arith.subf %7, %6 : vector<16x128xf32>
    %9 = math.exp %8 : vector<16x128xf32>
    %cst_4 = arith.constant 1.000000e+00 : f32
    %10 = vector.broadcast %cst_4 : f32 to vector<16x128xf32>
    %11 = arith.addf %10, %9 : vector<16x128xf32>
    %12 = math.log %11 : vector<16x128xf32>
    %cst_5 = arith.constant 0.000000e+00 : f32
    %13 = vector.broadcast %cst_5 : f32 to vector<16x128xf32>
    %14 = arith.maximumf %3, %13 : vector<16x128xf32>
    %15 = arith.addf %14, %12 : vector<16x128xf32>
    %cst_6 = arith.constant 0.000000e+00 : f32
    %16 = vector.broadcast %cst_6 : f32 to vector<16x128xf32>
    %17 = arith.subf %16, %3 : vector<16x128xf32>
    %cst_7 = arith.constant 0.000000e+00 : f32
    %18 = vector.broadcast %cst_7 : f32 to vector<16x128xf32>
    %19 = arith.maximumf %17, %18 : vector<16x128xf32>
    %20 = arith.addf %19, %12 : vector<16x128xf32>
    %cst_8 = arith.constant 1.000000e+02 : f32
    %21 = vector.broadcast %cst_8 : f32 to vector<16x128xf32>
    %22 = arith.minimumf %20, %21 : vector<16x128xf32>
    %23 = arith.mulf %5, %22 : vector<16x128xf32>
    %cst_9 = arith.constant 1.000000e+00 : f32
    %24 = vector.broadcast %cst_9 : f32 to vector<16x128xf32>
    %25 = arith.subf %24, %5 : vector<16x128xf32>
    %cst_10 = arith.constant 1.000000e+02 : f32
    %26 = vector.broadcast %cst_10 : f32 to vector<16x128xf32>
    %27 = arith.minimumf %15, %26 : vector<16x128xf32>
    %28 = arith.mulf %25, %27 : vector<16x128xf32>
    %29 = arith.addf %23, %28 : vector<16x128xf32>
    %cst_11 = arith.constant 0.000000e+00 : f32
    %30 = vector.broadcast %cst_11 : f32 to vector<16x128xf32>
    %31 = arith.subf %30, %29 : vector<16x128xf32>
    %32 = math.exp %31 : vector<16x128xf32>
    %cst_12 = arith.constant 1.000000e+00 : f32
    %33 = vector.broadcast %cst_12 : f32 to vector<16x128xf32>
    %34 = arith.subf %33, %32 : vector<16x128xf32>
    %cst_13 = arith.constant 2.500000e-01 : f32
    %35 = vector.broadcast %cst_13 : f32 to vector<16x128xf32>
    %36 = arith.mulf %35, %5 : vector<16x128xf32>
    %cst_14 = arith.constant 1.000000e+00 : f32
    %37 = vector.broadcast %cst_14 : f32 to vector<16x128xf32>
    %38 = arith.subf %37, %5 : vector<16x128xf32>
    %cst_15 = arith.constant 7.500000e-01 : f32
    %39 = vector.broadcast %cst_15 : f32 to vector<16x128xf32>
    %40 = arith.mulf %39, %38 : vector<16x128xf32>
    %41 = arith.addf %36, %40 : vector<16x128xf32>
    %42 = arith.mulf %34, %34 : vector<16x128xf32>
    %43 = arith.mulf %41, %42 : vector<16x128xf32>
    %44 = arith.mulf %43, %29 : vector<16x128xf32>
    %c0_16 = arith.constant 0 : index
    %c0_17 = arith.constant 0 : index
    %45 = vector.load %arg5[%c0_16, %c0_17] : memref<16x128xf32, #tpu.memory_space<vmem>>, vector<16x128xf32>
    %46 = arith.addf %45, %44 : vector<16x128xf32>
    %c0_18 = arith.constant 0 : index
    %c0_19 = arith.constant 0 : index
    %47 = vector.load %arg5[%c0_18, %c0_19] : memref<16x128xf32, #tpu.memory_space<vmem>>, vector<16x128xf32>
    tpu.vector_store %arg5[%c0_18, %c0_19], %46 {strides = array<i32>} : memref<16x128xf32, #tpu.memory_space<vmem>>, vector<16x128xf32>,
    %c0_i32_20 = arith.constant 0 : i32
    %48 = arith.cmpi eq, %arg1, %c0_i32_20 : i32
    %49 = arith.extui %48 : i1 to i32
    %c0_i32_21 = arith.constant 0 : i32
    %50 = arith.cmpi ne, %49, %c0_i32_21 : i32
    scf.if %50 {
      %c0_22 = arith.constant 0 : index
      %c0_23 = arith.constant 0 : index
      %51 = vector.load %arg5[%c0_22, %c0_23] : memref<16x128xf32, #tpu.memory_space<vmem>>, vector<16x128xf32>
      %52 = vector.shape_cast %51 : vector<16x128xf32> to vector<1x16x128xf32>
      %cst_24 = arith.constant dense<0.000000e+00> : vector<1xf32>
      %53 = vector.multi_reduction <add>, %52, %cst_24 [1, 2] : vector<1x16x128xf32> to vector<1xf32>
      %54 = vector.shape_cast %53 : vector<1xf32> to vector<1x1x1xf32>
      %55 = vector.extract %54[0, 0, 0] : f32 from vector<1x1x1xf32>
      %c0_25 = arith.constant 0 : index
      %c0_26 = arith.constant 0 : index
      %56 = memref.load %arg4[%c0_25, %c0_26] : memref<1x1xf32, #tpu.memory_space<smem>>
      memref.store %55, %arg4[%c0_25, %c0_26] : memref<1x1xf32, #tpu.memory_space<smem>>
    } else {
    }
    return
  }
  func.func @transform_0(%arg0: i32, %arg1: i32) -> (i32, i32) {
    %c1_i32 = arith.constant 1 : i32
    %0 = arith.muli %arg0, %c1_i32 : i32
    %1 = arith.addi %0, %arg1 : i32
    %c0_i32 = arith.constant 0 : i32
    %c0_i32_0 = arith.constant 0 : i32
    return %1, %c0_i32 : i32, i32
  }
  func.func @transform_1(%arg0: i32, %arg1: i32) -> (i32, i32) {
    %c1_i32 = arith.constant 1 : i32
    %0 = arith.muli %arg0, %c1_i32 : i32
    %1 = arith.addi %0, %arg1 : i32
    %c0_i32 = arith.constant 0 : i32
    %c0_i32_0 = arith.constant 0 : i32
    return %1, %c0_i32 : i32, i32
  }
  func.func @transform_2(%arg0: i32, %arg1: i32) -> (i32, i32) {
    %c0_i32 = arith.constant 0 : i32
    %c0_i32_0 = arith.constant 0 : i32
    return %arg0, %c0_i32 : i32, i32
  }
}

</mosaic_0001>

<llo_original>
// kernel: tpu_custom_call.1
$region0: #{tpu_custom_call.1}
  #allocation0 [shape = 'u32[]', space=smem, size = 0x4, offset = 0x4, fixed_abs, tag = 'smem constant byte address 0x4 - core index']
  #allocation1 [shape = 'u32[144,128]{1,0:T(1,128)}', space=vmem, size = 0x12000, scoped, tag = 'internal scratch']
  #allocation2 [shape = 'f32[16,128]{1,0:T(8,128)}', space=vmem, size = 0x2000, scoped, tag = 'scratch operand']
  %s0 = inlined_call_operand.hbm [shape: f32[16,128], index: 0, kind: input, shape index: {}]
  %s1 = inlined_call_operand.hbm [shape: bf16[16,128], index: 1, kind: input, shape index: {}]
  %s2 = inlined_call_operand.hbm [shape: f32[1,1], index: 2, kind: output, shape index: {}]
  %s3 = sld [smem:[#allocation0]]
  $region34: #{tpu_custom_call.1} parent=0
    _
  %s5 = ssub.s32 1, %s3
  %s6 = scalar_select 0, %s5, %s3
  $region1: #{tpu_custom_call.1} parent=0
    #allocation3 [shape = 'u8[8192]{0}', space=vmem, size = 0x2000, scoped, tag = 'input window, operand 0, single buffered']
    #allocation4 [shape = 's32[1]{0}', space=sflag, size = 0x4, scoped, tag = 'scoped memory for tpu_custom_call.1']
    #allocation5 [shape = 's32[1]{0}', space=sflag, size = 0x4, scoped, tag = 'scoped memory for tpu_custom_call.1']
    #allocation6 [shape = 'u8[4096]{0}', space=vmem, size = 0x1000, scoped, tag = 'input window, operand 1, single buffered']
    #allocation7 [shape = 's32[1]{0}', space=sflag, size = 0x4, scoped, tag = 'scoped memory for tpu_custom_call.1']
    #allocation8 [shape = 'u8[512]{0}', space=smem, size = 0x200, scoped, tag = 'output window, operand 0, single buffered']
    %7 = vsyncpa [#allocation4], 0
    %8 = vsyncpa [#allocation7], 0
    %9 = vsyncpa [#allocation5], 0
    // Predicated region
    $region2: #{tpu_custom_call.1} parent=1 // pred_check
      _
    $region3: #{tpu_custom_call.1} parent=1 // pred_check_branch
      %11 = sbr.rel (0) target = $region5
    $region4: #{tpu_custom_call.1} parent=1 // pred_region
      %s12 = sadd.s32 0, 0
      %s13 = smul.u32 2, %s12
      %s15 = ssub.s32 256, 256
      %16 = vsyncadd [#allocation4], %s15
      %s17 = smul.addr %s13, 128
      %s18 = scalar_lea.hbm %s0, %s17
      %s19 = sshll.u32 [#allocation3], 4
      %s20 = int_to_ptr.vmem [resolvable:$true] %s19
      %25 = dma.hbm_to_vmem [thread:$0]  %s18, 256, %s20, [#allocation4], 128, 128, 8
    $region5: #{tpu_custom_call.1} parent=1 // pred_fallthru
      _
    // Predicated region
    $region6: #{tpu_custom_call.1} parent=1 // pred_check
      _
    $region7: #{tpu_custom_call.1} parent=1 // pred_check_branch
      %27 = sbr.rel (0) target = $region9
    $region8: #{tpu_custom_call.1} parent=1 // pred_region
      %s28 = sadd.s32 0, 0
      %s29 = smul.u32 2, %s28
      %s31 = ssub.s32 128, 128
      %32 = vsyncadd [#allocation7], %s31
      %s33 = smul.addr %s29, 64
      %s34 = scalar_lea.hbm %s1, %s33
      %s35 = sshll.u32 [#allocation6], 4
      %s36 = int_to_ptr.vmem [resolvable:$true] %s35
      %41 = dma.hbm_to_vmem [thread:$0]  %s34, 128, %s36, [#allocation7], 64, 64, 4
    $region9: #{tpu_custom_call.1} parent=1 // pred_fallthru
      _
    // Predicated region
    $region10: #{tpu_custom_call.1} parent=1 // pred_check
      _
    $region11: #{tpu_custom_call.1} parent=1 // pred_check_branch
      %43 = sbr.rel (0) target = $region13
    $region12: #{tpu_custom_call.1} parent=1 // pred_region
      %44 = dma.done [#allocation4], 256
    $region13: #{tpu_custom_call.1} parent=1 // pred_fallthru
      _
    // Predicated region
    $region14: #{tpu_custom_call.1} parent=1 // pred_check
      _
    $region15: #{tpu_custom_call.1} parent=1 // pred_check_branch
      %46 = sbr.rel (0) target = $region17
    $region16: #{tpu_custom_call.1} parent=1 // pred_region
      %47 = dma.done [#allocation7], 128
    $region17: #{tpu_custom_call.1} parent=1 // pred_fallthru
      _
    %s48 = sadd.s32 0, 0
    %s49 = smul.u32 2, %s48
    %s50 = sadd.s32 0, 0
    %s51 = smul.u32 2, %s50
    %p52 = scmp.eq.s32.totalorder 0, 0
    // Predicated region
    $region18: #{tpu_custom_call.1} parent=1 // pred_check
      %p53 = pneg %p52
    $region19: #{tpu_custom_call.1} parent=1 // pred_check_branch
      %55 = sbr.rel (%p53) target = $region21
    $region20: #{tpu_custom_call.1} parent=1 // pred_region
      %56 = vst [vmem:[#allocation2] sm:$0xff] 0.0
      %57 = vst [vmem:[#allocation2 + $0x8] sm:$0xff] 0.0
    $region21: #{tpu_custom_call.1} parent=1 // pred_fallthru
      _
    %v58 = vld [vmem:[#allocation3] sm:$0xff]
    %v59 = vld [vmem:[#allocation3 + $0x8] sm:$0xff]
    %v60 = vld [vmem:[#allocation6] sm:$0xf]
    %v61 = vld [vmem:[#allocation6 + $0x4] sm:$0xf]
    %v62 = vunpack.c.l.bf16 %v60
    %v63 = vunpack.c.l.bf16 %v61
    %v64 = vand.u32 2147483647, %v58
    %v65 = vand.u32 2147483647, %v59
    %v66 = vsub.f32 0.0, %v64
    %v67 = vsub.f32 0.0, %v65
    %v68 = vmul.f32 %v66, 1.442695
    %v69 = vpow.pop %v68
    %v70 = vmul.f32 %v67, 1.442695
    %v71 = vpow.pop %v70
    %v72 = vadd.f32 %v69, 1.0
    %v73 = vadd.f32 %v71, 1.0
    %v74 = vlog2.pop %v72
    %v75 = vmul.f32 %v74, 0.6931472
    %v76 = vlog2.pop %v73
    %v77 = vmul.f32 %v76, 0.6931472
    %v78 = vmax.f32 %v58, 0.0
    %v79 = vmax.f32 %v59, 0.0
    %v80 = vadd.f32 %v78, %v75
    %v81 = vadd.f32 %v79, %v77
    %v82 = vsub.f32 0.0, %v58
    %v83 = vsub.f32 0.0, %v59
    %v84 = vmax.f32 %v82, 0.0
    %v85 = vmax.f32 %v83, 0.0
    %v86 = vadd.f32 %v84, %v75
    %v87 = vadd.f32 %v85, %v77
    %v88 = vmin.f32 %v86, 100.0
    %v89 = vmin.f32 %v87, 100.0
    %v90 = vmul.f32 %v62, %v88
    %v91 = vmul.f32 %v63, %v89
    %v92 = vsub.f32 1.0, %v62
    %v93 = vsub.f32 1.0, %v63
    %v94 = vmin.f32 %v80, 100.0
    %v95 = vmin.f32 %v81, 100.0
    %v96 = vmul.f32 %v92, %v94
    %v97 = vmul.f32 %v93, %v95
    %v98 = vadd.f32 %v90, %v96
    %v99 = vadd.f32 %v91, %v97
    %v100 = vsub.f32 0.0, %v98
    %v101 = vsub.f32 0.0, %v99
    %v102 = vmul.f32 %v100, 1.442695
    %v103 = vpow.pop %v102
    %v104 = vmul.f32 %v101, 1.442695
    %v105 = vpow.pop %v104
    %v106 = vsub.f32 1.0, %v103
    %v107 = vsub.f32 1.0, %v105
    %v108 = vmul.f32 %v62, 0.25
    %v109 = vmul.f32 %v63, 0.25
    %v110 = vmul.f32 %v92, 0.75
    %v111 = vmul.f32 %v93, 0.75
    %v112 = vadd.f32 %v108, %v110
    %v113 = vadd.f32 %v109, %v111
    %v114 = vmul.f32 %v106, %v106
    %v115 = vmul.f32 %v107, %v107
    %v116 = vmul.f32 %v112, %v114
    %v117 = vmul.f32 %v113, %v115
    %v118 = vmul.f32 %v116, %v98
    %v119 = vmul.f32 %v117, %v99
    %v120 = vld [vmem:[#allocation2] sm:$0xff]
    %v121 = vld [vmem:[#allocation2 + $0x8] sm:$0xff]
    %v122 = vadd.f32 %v120, %v118
    %v123 = vadd.f32 %v121, %v119
    %124 = vst [vmem:[#allocation2] sm:$0xff] %v122
    %125 = vst [vmem:[#allocation2 + $0x8] sm:$0xff] %v123
    // Predicated region
    $region22: #{tpu_custom_call.1} parent=1 // pred_check
      %p126 = pneg %p52
    $region23: #{tpu_custom_call.1} parent=1 // pred_check_branch
      %128 = sbr.rel (%p126) target = $region25
    $region24: #{tpu_custom_call.1} parent=1 // pred_region
      %v129 = vld [vmem:[#allocation2] sm:$0xff]
      %v130 = vld [vmem:[#allocation2 + $0x8] sm:$0xff]
      %v131 = vadd.f32 %v129, %v130
      %132 = vadd.xlane.f32.xlu0 %v131
      %v133 = vpop.xlane.xlu0 %132
      %v134 = vrot.slane %v133, 4
      %v135 = vadd.f32 %v133, %v134
      %v136 = vrot.slane %v135, 2
      %v137 = vadd.f32 %v135, %v136
      %v138 = vrot.slane %v137, 1
      %v139 = vadd.f32 %v137, %v138
      %s140 = vtos %v139
      %s141 = scalar_lea.smem [#allocation8], 0
      %142 = sst [smem:[%s141]] %s140
    $region25: #{tpu_custom_call.1} parent=1 // pred_fallthru
      _
    // Predicated region
    $region26: #{tpu_custom_call.1} parent=1 // pred_check
      _
    $region27: #{tpu_custom_call.1} parent=1 // pred_check_branch
      %144 = sbr.rel (0) target = $region29
    $region28: #{tpu_custom_call.1} parent=1 // pred_region
      %s146 = ssub.s32 16, 16
      %147 = vsyncadd [#allocation5], %s146
      %150 = dma.smem_to_hbm [#allocation8], 16, %s2, [#allocation5]
    $region29: #{tpu_custom_call.1} parent=1 // pred_fallthru
      _
    // Predicated region
    $region30: #{tpu_custom_call.1} parent=1 // pred_check
      _
    $region31: #{tpu_custom_call.1} parent=1 // pred_check_branch
      %152 = sbr.rel (0) target = $region33
    $region32: #{tpu_custom_call.1} parent=1 // pred_region
      %153 = dma.done [#allocation5], 16
    $region33: #{tpu_custom_call.1} parent=1 // pred_fallthru
      _
    %154 = sfence
    %155 = vsyncpa [#allocation4], 1
    %156 = vsyncpa [#allocation7], 1
    %157 = vsyncpa [#allocation5], 1

</llo_original>
